<compile_context>
chip_gen: v6e
topology: v6e:2x2x1
jax: 0.10.0
libtpu: 0.0.40
codegen_flags: <defaults>
</compile_context>

<pallas_src>
import jax
import jax.numpy as jnp
from jax import lax
from jax.experimental import pallas as pl
from jax.experimental.pallas import tpu as pltpu

# Module hyper-parameters (module-level globals: use_embedding=True, emb dim 8)
IN_FEATURES = 40           # P: number of categorical positions
EMB_DIM = 8                # D
VOCAB = 21                 # V: embedding_dict_size
H1 = 20
H2 = 5
OUT_FEATURES = 1
FLAT = IN_FEATURES * VOCAB          # 840: flattened (vocab, position) axis (v-major)
PACK_COLS = 4                       # packed param columns: b1 | b2 | w3 | b3


def fused_mlp_kernel(xT_ref, wfT_ref, w2T_ref, pk_ref, o_ref, oh_ref):
    """Embedding gather (one-hot written to VMEM scratch) + 3-layer MLP, fused.

    Shapes (tb = batch tile, batch lives on the lane axis):
      xT_ref : (P, tb) int32        wfT_ref: (H1, FLAT) f32
      w2T_ref: (H2, H1) f32         pk_ref : (H1, 4)    f32
      o_ref  : (1, tb) f32          oh_ref : (FLAT, tb) f32 VMEM scratch
    """
    idx = xT_ref[...]                                   # (P, tb) int32, stays in vregs

    # Build one_hot^T row-group by row-group: rows [v*P, (v+1)*P) <- (idx == v).
    # 21 small compares on dense (P, tb) tiles; each result is stored once
    # (sublane-aligned static slices, offsets are multiples of 8).
    one = jnp.float32(1.0)
    zero = jnp.float32(0.0)
    for v in range(VOCAB):
        oh_ref[pl.ds(v * IN_FEATURES, IN_FEATURES), :] = jnp.where(idx == v, one, zero)

    pk = pk_ref[...]                                    # (H1, 4)
    b1c = pk[:, 0:1]                                    # (H1, 1)
    b2c = pk[:H2, 1:2]                                  # (H2, 1)
    w3c = pk[:H2, 2:3]                                  # (H2, 1)
    b3c = pk[0:1, 3:4]                                  # (1, 1)

    # fc1 (embedding table already folded into wfT) + ReLU.
    h1 = jnp.dot(wfT_ref[...], oh_ref[...],
                 preferred_element_type=jnp.float32) + b1c        # (H1, tb)
    h1 = jnp.maximum(h1, 0.0)

    # fc2 + ReLU.
    h2 = jnp.dot(w2T_ref[...], h1,
                 preferred_element_type=jnp.float32) + b2c        # (H2, tb)
    h2 = jnp.maximum(h2, 0.0)

    # Output layer on the VPU/XLU (a 5-wide dot is not worth an MXU push);
    # result is a lane-dense (1, tb) row.
    o_ref[...] = jnp.sum(h2 * w3c, axis=0, keepdims=True) + b3c


def init_params(key):
    """Raw parameters in PyTorch-equivalent layout (weights stored (in, out))."""
    k_emb, k1, k2, k3, kb1, kb2, kb3 = jax.random.split(key, 7)
    emb = jax.random.normal(k_emb, (VOCAB, EMB_DIM), jnp.float32)
    w1 = jax.random.normal(k1, (IN_FEATURES * EMB_DIM, H1), jnp.float32) * 0.05
    b1 = jax.random.normal(kb1, (H1,), jnp.float32) * 0.05
    w2 = jax.random.normal(k2, (H1, H2), jnp.float32) * 0.1
    b2 = jax.random.normal(kb2, (H2,), jnp.float32) * 0.1
    w3 = jax.random.normal(k3, (H2, OUT_FEATURES), jnp.float32) * 0.1
    b3 = jax.random.normal(kb3, (OUT_FEATURES,), jnp.float32) * 0.1
    return (emb, w1, b1, w2, b2, w3, b3)


def preprocess_params(raw_params):
    """One-time folding: emb folded into fc1 (v-major flat axis, transposed);
    biases and the out-layer row packed into one (H1, 4) column array."""
    emb, w1, b1, w2, b2, w3, b3 = raw_params
    w1_r = w1.reshape(IN_FEATURES, EMB_DIM, H1)
    # wfT[h, v*P + p] = sum_d emb[v, d] * w1[p*EMB_DIM + d, h]
    wfT = jnp.einsum("vd,pdh->hvp", emb, w1_r,
                     precision=lax.Precision.HIGHEST).reshape(H1, FLAT)
    w2T = w2.T                                           # (H2, H1)
    packed = jnp.zeros((H1, PACK_COLS), jnp.float32)
    packed = packed.at[:, 0].set(b1)
    packed = packed.at[:H2, 1].set(b2)
    packed = packed.at[:H2, 2].set(w3[:, 0])
    packed = packed.at[0, 3].set(b3[0])
    return (wfT, w2T, packed)


def model_forward(x_idx, params, *, tile_b=512):
    wfT, w2T, packed = params
    B = x_idx.shape[0]
    xT = x_idx.T                                         # (P, B) int32, batch on lanes

    if B <= tile_b:
        # Small batch: single block, no grid/pipelining machinery — indices,
        # weights and the one-hot scratch all live in VMEM for the kernel.
        out = pl.pallas_call(
            fused_mlp_kernel,
            out_shape=jax.ShapeDtypeStruct((1, B), jnp.float32),
            scratch_shapes=[pltpu.VMEM((FLAT, B), jnp.float32)],
        )(xT, wfT, w2T, packed)
        return out.reshape(B, OUT_FEATURES)

    # Large batch: tile the batch (lane) axis; weights resident (index_map (0,0));
    # batch axis is embarrassingly parallel -> megacore sharding on v7x.
    # No padding: ragged last tile handled by Pallas OOB masking.
    grid = pl.cdiv(B, tile_b)
    out = pl.pallas_call(
        fused_mlp_kernel,
        out_shape=jax.ShapeDtypeStruct((1, B), jnp.float32),
        grid=(grid,),
        in_specs=[
            pl.BlockSpec((IN_FEATURES, tile_b), lambda i: (0, i)),
            pl.BlockSpec((H1, FLAT), lambda i: (0, 0)),
            pl.BlockSpec((H2, H1), lambda i: (0, 0)),
            pl.BlockSpec((H1, PACK_COLS), lambda i: (0, 0)),
        ],
        out_specs=pl.BlockSpec((1, tile_b), lambda i: (0, i)),
        scratch_shapes=[pltpu.VMEM((FLAT, tile_b), jnp.float32)],
        compiler_params=pltpu.CompilerParams(
            dimension_semantics=("parallel",),
            vmem_limit_bytes=32 << 20),
    )(xT, wfT, w2T, packed)
    return out.reshape(B, OUT_FEATURES)


def reference_forward(x_idx, raw_params):
    """Plain-JAX reference mirroring the PyTorch module."""
    emb, w1, b1, w2, b2, w3, b3 = raw_params
    B = x_idx.shape[0]
    x = jnp.take(emb, x_idx, axis=0).reshape(B, IN_FEATURES * EMB_DIM)
    h1 = jnp.maximum(jnp.dot(x, w1, precision=lax.Precision.HIGHEST) + b1, 0.0)
    h2 = jnp.maximum(jnp.dot(h1, w2, precision=lax.Precision.HIGHEST) + b2, 0.0)
    return jnp.dot(h2, w3, precision=lax.Precision.HIGHEST) + b3


if __name__ == "__main__":
    key = jax.random.PRNGKey(0)
    k_params, k_x, k_x2 = jax.random.split(key, 3)

    raw_params = init_params(k_params)
    params = preprocess_params(raw_params)

    fwd = jax.jit(model_forward)

    # Small batch -> grid-less single-block path.
    B = 8
    x_idx = jax.random.randint(k_x, (B, IN_FEATURES), 0, VOCAB, dtype=jnp.int32)
    out = fwd(x_idx, params)
    jax.block_until_ready(out)
    ref = reference_forward(x_idx, raw_params)
    assert out.shape == (B, OUT_FEATURES)
    assert jnp.allclose(out, ref, atol=1e-4, rtol=1e-4), "small-batch mismatch"

    # Larger, non-multiple-of-tile batch -> batch-tiled parallel grid path
    # (exercises the ragged OOB-masked last tile, no padding round trip).
    B2 = 1000
    x_idx2 = jax.random.randint(k_x2, (B2, IN_FEATURES), 0, VOCAB, dtype=jnp.int32)
    out2 = fwd(x_idx2, params)
    jax.block_until_ready(out2)
    ref2 = reference_forward(x_idx2, raw_params)
    assert out2.shape == (B2, OUT_FEATURES)
    assert jnp.allclose(out2, ref2, atol=1e-4, rtol=1e-4), "tiled-batch mismatch"

    print("KERNEL_OK")
</pallas_src>

<mosaic_0001>
module attributes {stable_mosaic.version = 11 : i64} {
  func.func @fused_mlp_kernel(%arg0: memref<40x8xi32, #tpu.memory_space<vmem>>, %arg1: memref<20x840xf32, #tpu.memory_space<vmem>>, %arg2: memref<5x20xf32, #tpu.memory_space<vmem>>, %arg3: memref<20x4xf32, #tpu.memory_space<vmem>>, %arg4: memref<1x8xf32, #tpu.memory_space<vmem>>, %arg5: memref<840x8xf32, #tpu.memory_space<vmem>>) attributes {dimension_semantics = [], scalar_prefetch = 0 : i64, scratch_operands = 1 : i64, tpu.core_type = #tpu.core_type<tc>} {
    %c0 = arith.constant 0 : index
    %c0_0 = arith.constant 0 : index
    %0 = vector.load %arg0[%c0, %c0_0] : memref<40x8xi32, #tpu.memory_space<vmem>>, vector<40x8xi32>
    %c0_i32 = arith.constant 0 : i32
    %1 = vector.broadcast %c0_i32 : i32 to vector<40x8xi32>
    %2 = arith.cmpi eq, %0, %1 : vector<40x8xi32>
    %cst = arith.constant 1.000000e+00 : f32
    %cst_1 = arith.constant 0.000000e+00 : f32
    %3 = vector.broadcast %cst : f32 to vector<40x8xf32>
    %4 = vector.broadcast %cst_1 : f32 to vector<40x8xf32>
    %5 = arith.select %2, %3, %4 : vector<40x8xi1>, vector<40x8xf32>
    %c0_2 = arith.constant 0 : index
    %c0_3 = arith.constant 0 : index
    %6 = vector.load %arg5[%c0_2, %c0_3] : memref<840x8xf32, #tpu.memory_space<vmem>>, vector<40x8xf32>
    tpu.vector_store %arg5[%c0_2, %c0_3], %5 {strides = array<i32>} : memref<840x8xf32, #tpu.memory_space<vmem>>, vector<40x8xf32>,
    %c1_i32 = arith.constant 1 : i32
    %7 = vector.broadcast %c1_i32 : i32 to vector<40x8xi32>
    %8 = arith.cmpi eq, %0, %7 : vector<40x8xi32>
    %cst_4 = arith.constant 1.000000e+00 : f32
    %cst_5 = arith.constant 0.000000e+00 : f32
    %9 = vector.broadcast %cst_4 : f32 to vector<40x8xf32>
    %10 = vector.broadcast %cst_5 : f32 to vector<40x8xf32>
    %11 = arith.select %8, %9, %10 : vector<40x8xi1>, vector<40x8xf32>
    %c40 = arith.constant 40 : index
    %c0_6 = arith.constant 0 : index
    %12 = vector.load %arg5[%c40, %c0_6] : memref<840x8xf32, #tpu.memory_space<vmem>>, vector<40x8xf32>
    tpu.vector_store %arg5[%c40, %c0_6], %11 {strides = array<i32>} : memref<840x8xf32, #tpu.memory_space<vmem>>, vector<40x8xf32>,
    %c2_i32 = arith.constant 2 : i32
    %13 = vector.broadcast %c2_i32 : i32 to vector<40x8xi32>
    %14 = arith.cmpi eq, %0, %13 : vector<40x8xi32>
    %cst_7 = arith.constant 1.000000e+00 : f32
    %cst_8 = arith.constant 0.000000e+00 : f32
    %15 = vector.broadcast %cst_7 : f32 to vector<40x8xf32>
    %16 = vector.broadcast %cst_8 : f32 to vector<40x8xf32>
    %17 = arith.select %14, %15, %16 : vector<40x8xi1>, vector<40x8xf32>
    %c80 = arith.constant 80 : index
    %c0_9 = arith.constant 0 : index
    %18 = vector.load %arg5[%c80, %c0_9] : memref<840x8xf32, #tpu.memory_space<vmem>>, vector<40x8xf32>
    tpu.vector_store %arg5[%c80, %c0_9], %17 {strides = array<i32>} : memref<840x8xf32, #tpu.memory_space<vmem>>, vector<40x8xf32>,
    %c3_i32 = arith.constant 3 : i32
    %19 = vector.broadcast %c3_i32 : i32 to vector<40x8xi32>
    %20 = arith.cmpi eq, %0, %19 : vector<40x8xi32>
    %cst_10 = arith.constant 1.000000e+00 : f32
    %cst_11 = arith.constant 0.000000e+00 : f32
    %21 = vector.broadcast %cst_10 : f32 to vector<40x8xf32>
    %22 = vector.broadcast %cst_11 : f32 to vector<40x8xf32>
    %23 = arith.select %20, %21, %22 : vector<40x8xi1>, vector<40x8xf32>
    %c120 = arith.constant 120 : index
    %c0_12 = arith.constant 0 : index
    %24 = vector.load %arg5[%c120, %c0_12] : memref<840x8xf32, #tpu.memory_space<vmem>>, vector<40x8xf32>
    tpu.vector_store %arg5[%c120, %c0_12], %23 {strides = array<i32>} : memref<840x8xf32, #tpu.memory_space<vmem>>, vector<40x8xf32>,
    %c4_i32 = arith.constant 4 : i32
    %25 = vector.broadcast %c4_i32 : i32 to vector<40x8xi32>
    %26 = arith.cmpi eq, %0, %25 : vector<40x8xi32>
    %cst_13 = arith.constant 1.000000e+00 : f32
    %cst_14 = arith.constant 0.000000e+00 : f32
    %27 = vector.broadcast %cst_13 : f32 to vector<40x8xf32>
    %28 = vector.broadcast %cst_14 : f32 to vector<40x8xf32>
    %29 = arith.select %26, %27, %28 : vector<40x8xi1>, vector<40x8xf32>
    %c160 = arith.constant 160 : index
    %c0_15 = arith.constant 0 : index
    %30 = vector.load %arg5[%c160, %c0_15] : memref<840x8xf32, #tpu.memory_space<vmem>>, vector<40x8xf32>
    tpu.vector_store %arg5[%c160, %c0_15], %29 {strides = array<i32>} : memref<840x8xf32, #tpu.memory_space<vmem>>, vector<40x8xf32>,
    %c5_i32 = arith.constant 5 : i32
    %31 = vector.broadcast %c5_i32 : i32 to vector<40x8xi32>
    %32 = arith.cmpi eq, %0, %31 : vector<40x8xi32>
    %cst_16 = arith.constant 1.000000e+00 : f32
    %cst_17 = arith.constant 0.000000e+00 : f32
    %33 = vector.broadcast %cst_16 : f32 to vector<40x8xf32>
    %34 = vector.broadcast %cst_17 : f32 to vector<40x8xf32>
    %35 = arith.select %32, %33, %34 : vector<40x8xi1>, vector<40x8xf32>
    %c200 = arith.constant 200 : index
    %c0_18 = arith.constant 0 : index
    %36 = vector.load %arg5[%c200, %c0_18] : memref<840x8xf32, #tpu.memory_space<vmem>>, vector<40x8xf32>
    tpu.vector_store %arg5[%c200, %c0_18], %35 {strides = array<i32>} : memref<840x8xf32, #tpu.memory_space<vmem>>, vector<40x8xf32>,
    %c6_i32 = arith.constant 6 : i32
    %37 = vector.broadcast %c6_i32 : i32 to vector<40x8xi32>
    %38 = arith.cmpi eq, %0, %37 : vector<40x8xi32>
    %cst_19 = arith.constant 1.000000e+00 : f32
    %cst_20 = arith.constant 0.000000e+00 : f32
    %39 = vector.broadcast %cst_19 : f32 to vector<40x8xf32>
    %40 = vector.broadcast %cst_20 : f32 to vector<40x8xf32>
    %41 = arith.select %38, %39, %40 : vector<40x8xi1>, vector<40x8xf32>
    %c240 = arith.constant 240 : index
    %c0_21 = arith.constant 0 : index
    %42 = vector.load %arg5[%c240, %c0_21] : memref<840x8xf32, #tpu.memory_space<vmem>>, vector<40x8xf32>
    tpu.vector_store %arg5[%c240, %c0_21], %41 {strides = array<i32>} : memref<840x8xf32, #tpu.memory_space<vmem>>, vector<40x8xf32>,
    %c7_i32 = arith.constant 7 : i32
    %43 = vector.broadcast %c7_i32 : i32 to vector<40x8xi32>
    %44 = arith.cmpi eq, %0, %43 : vector<40x8xi32>
    %cst_22 = arith.constant 1.000000e+00 : f32
    %cst_23 = arith.constant 0.000000e+00 : f32
    %45 = vector.broadcast %cst_22 : f32 to vector<40x8xf32>
    %46 = vector.broadcast %cst_23 : f32 to vector<40x8xf32>
    %47 = arith.select %44, %45, %46 : vector<40x8xi1>, vector<40x8xf32>
    %c280 = arith.constant 280 : index
    %c0_24 = arith.constant 0 : index
    %48 = vector.load %arg5[%c280, %c0_24] : memref<840x8xf32, #tpu.memory_space<vmem>>, vector<40x8xf32>
    tpu.vector_store %arg5[%c280, %c0_24], %47 {strides = array<i32>} : memref<840x8xf32, #tpu.memory_space<vmem>>, vector<40x8xf32>,
    %c8_i32 = arith.constant 8 : i32
    %49 = vector.broadcast %c8_i32 : i32 to vector<40x8xi32>
    %50 = arith.cmpi eq, %0, %49 : vector<40x8xi32>
    %cst_25 = arith.constant 1.000000e+00 : f32
    %cst_26 = arith.constant 0.000000e+00 : f32
    %51 = vector.broadcast %cst_25 : f32 to vector<40x8xf32>
    %52 = vector.broadcast %cst_26 : f32 to vector<40x8xf32>
    %53 = arith.select %50, %51, %52 : vector<40x8xi1>, vector<40x8xf32>
    %c320 = arith.constant 320 : index
    %c0_27 = arith.constant 0 : index
    %54 = vector.load %arg5[%c320, %c0_27] : memref<840x8xf32, #tpu.memory_space<vmem>>, vector<40x8xf32>
    tpu.vector_store %arg5[%c320, %c0_27], %53 {strides = array<i32>} : memref<840x8xf32, #tpu.memory_space<vmem>>, vector<40x8xf32>,
    %c9_i32 = arith.constant 9 : i32
    %55 = vector.broadcast %c9_i32 : i32 to vector<40x8xi32>
    %56 = arith.cmpi eq, %0, %55 : vector<40x8xi32>
    %cst_28 = arith.constant 1.000000e+00 : f32
    %cst_29 = arith.constant 0.000000e+00 : f32
    %57 = vector.broadcast %cst_28 : f32 to vector<40x8xf32>
    %58 = vector.broadcast %cst_29 : f32 to vector<40x8xf32>
    %59 = arith.select %56, %57, %58 : vector<40x8xi1>, vector<40x8xf32>
    %c360 = arith.constant 360 : index
    %c0_30 = arith.constant 0 : index
    %60 = vector.load %arg5[%c360, %c0_30] : memref<840x8xf32, #tpu.memory_space<vmem>>, vector<40x8xf32>
    tpu.vector_store %arg5[%c360, %c0_30], %59 {strides = array<i32>} : memref<840x8xf32, #tpu.memory_space<vmem>>, vector<40x8xf32>,
    %c10_i32 = arith.constant 10 : i32
    %61 = vector.broadcast %c10_i32 : i32 to vector<40x8xi32>
    %62 = arith.cmpi eq, %0, %61 : vector<40x8xi32>
    %cst_31 = arith.constant 1.000000e+00 : f32
    %cst_32 = arith.constant 0.000000e+00 : f32
    %63 = vector.broadcast %cst_31 : f32 to vector<40x8xf32>
    %64 = vector.broadcast %cst_32 : f32 to vector<40x8xf32>
    %65 = arith.select %62, %63, %64 : vector<40x8xi1>, vector<40x8xf32>
    %c400 = arith.constant 400 : index
    %c0_33 = arith.constant 0 : index
    %66 = vector.load %arg5[%c400, %c0_33] : memref<840x8xf32, #tpu.memory_space<vmem>>, vector<40x8xf32>
    tpu.vector_store %arg5[%c400, %c0_33], %65 {strides = array<i32>} : memref<840x8xf32, #tpu.memory_space<vmem>>, vector<40x8xf32>,
    %c11_i32 = arith.constant 11 : i32
    %67 = vector.broadcast %c11_i32 : i32 to vector<40x8xi32>
    %68 = arith.cmpi eq, %0, %67 : vector<40x8xi32>
    %cst_34 = arith.constant 1.000000e+00 : f32
    %cst_35 = arith.constant 0.000000e+00 : f32
    %69 = vector.broadcast %cst_34 : f32 to vector<40x8xf32>
    %70 = vector.broadcast %cst_35 : f32 to vector<40x8xf32>
    %71 = arith.select %68, %69, %70 : vector<40x8xi1>, vector<40x8xf32>
    %c440 = arith.constant 440 : index
    %c0_36 = arith.constant 0 : index
    %72 = vector.load %arg5[%c440, %c0_36] : memref<840x8xf32, #tpu.memory_space<vmem>>, vector<40x8xf32>
    tpu.vector_store %arg5[%c440, %c0_36], %71 {strides = array<i32>} : memref<840x8xf32, #tpu.memory_space<vmem>>, vector<40x8xf32>,
    %c12_i32 = arith.constant 12 : i32
    %73 = vector.broadcast %c12_i32 : i32 to vector<40x8xi32>
    %74 = arith.cmpi eq, %0, %73 : vector<40x8xi32>
    %cst_37 = arith.constant 1.000000e+00 : f32
    %cst_38 = arith.constant 0.000000e+00 : f32
    %75 = vector.broadcast %cst_37 : f32 to vector<40x8xf32>
    %76 = vector.broadcast %cst_38 : f32 to vector<40x8xf32>
    %77 = arith.select %74, %75, %76 : vector<40x8xi1>, vector<40x8xf32>
    %c480 = arith.constant 480 : index
    %c0_39 = arith.constant 0 : index
    %78 = vector.load %arg5[%c480, %c0_39] : memref<840x8xf32, #tpu.memory_space<vmem>>, vector<40x8xf32>
    tpu.vector_store %arg5[%c480, %c0_39], %77 {strides = array<i32>} : memref<840x8xf32, #tpu.memory_space<vmem>>, vector<40x8xf32>,
    %c13_i32 = arith.constant 13 : i32
    %79 = vector.broadcast %c13_i32 : i32 to vector<40x8xi32>
    %80 = arith.cmpi eq, %0, %79 : vector<40x8xi32>
    %cst_40 = arith.constant 1.000000e+00 : f32
    %cst_41 = arith.constant 0.000000e+00 : f32
    %81 = vector.broadcast %cst_40 : f32 to vector<40x8xf32>
    %82 = vector.broadcast %cst_41 : f32 to vector<40x8xf32>
    %83 = arith.select %80, %81, %82 : vector<40x8xi1>, vector<40x8xf32>
    %c520 = arith.constant 520 : index
    %c0_42 = arith.constant 0 : index
    %84 = vector.load %arg5[%c520, %c0_42] : memref<840x8xf32, #tpu.memory_space<vmem>>, vector<40x8xf32>
    tpu.vector_store %arg5[%c520, %c0_42], %83 {strides = array<i32>} : memref<840x8xf32, #tpu.memory_space<vmem>>, vector<40x8xf32>,
    %c14_i32 = arith.constant 14 : i32
    %85 = vector.broadcast %c14_i32 : i32 to vector<40x8xi32>
    %86 = arith.cmpi eq, %0, %85 : vector<40x8xi32>
    %cst_43 = arith.constant 1.000000e+00 : f32
    %cst_44 = arith.constant 0.000000e+00 : f32
    %87 = vector.broadcast %cst_43 : f32 to vector<40x8xf32>
    %88 = vector.broadcast %cst_44 : f32 to vector<40x8xf32>
    %89 = arith.select %86, %87, %88 : vector<40x8xi1>, vector<40x8xf32>
    %c560 = arith.constant 560 : index
    %c0_45 = arith.constant 0 : index
    %90 = vector.load %arg5[%c560, %c0_45] : memref<840x8xf32, #tpu.memory_space<vmem>>, vector<40x8xf32>
    tpu.vector_store %arg5[%c560, %c0_45], %89 {strides = array<i32>} : memref<840x8xf32, #tpu.memory_space<vmem>>, vector<40x8xf32>,
    %c15_i32 = arith.constant 15 : i32
    %91 = vector.broadcast %c15_i32 : i32 to vector<40x8xi32>
    %92 = arith.cmpi eq, %0, %91 : vector<40x8xi32>
    %cst_46 = arith.constant 1.000000e+00 : f32
    %cst_47 = arith.constant 0.000000e+00 : f32
    %93 = vector.broadcast %cst_46 : f32 to vector<40x8xf32>
    %94 = vector.broadcast %cst_47 : f32 to vector<40x8xf32>
    %95 = arith.select %92, %93, %94 : vector<40x8xi1>, vector<40x8xf32>
    %c600 = arith.constant 600 : index
    %c0_48 = arith.constant 0 : index
    %96 = vector.load %arg5[%c600, %c0_48] : memref<840x8xf32, #tpu.memory_space<vmem>>, vector<40x8xf32>
    tpu.vector_store %arg5[%c600, %c0_48], %95 {strides = array<i32>} : memref<840x8xf32, #tpu.memory_space<vmem>>, vector<40x8xf32>,
    %c16_i32 = arith.constant 16 : i32
    %97 = vector.broadcast %c16_i32 : i32 to vector<40x8xi32>
    %98 = arith.cmpi eq, %0, %97 : vector<40x8xi32>
    %cst_49 = arith.constant 1.000000e+00 : f32
    %cst_50 = arith.constant 0.000000e+00 : f32
    %99 = vector.broadcast %cst_49 : f32 to vector<40x8xf32>
    %100 = vector.broadcast %cst_50 : f32 to vector<40x8xf32>
    %101 = arith.select %98, %99, %100 : vector<40x8xi1>, vector<40x8xf32>
    %c640 = arith.constant 640 : index
    %c0_51 = arith.constant 0 : index
    %102 = vector.load %arg5[%c640, %c0_51] : memref<840x8xf32, #tpu.memory_space<vmem>>, vector<40x8xf32>
    tpu.vector_store %arg5[%c640, %c0_51], %101 {strides = array<i32>} : memref<840x8xf32, #tpu.memory_space<vmem>>, vector<40x8xf32>,
    %c17_i32 = arith.constant 17 : i32
    %103 = vector.broadcast %c17_i32 : i32 to vector<40x8xi32>
    %104 = arith.cmpi eq, %0, %103 : vector<40x8xi32>
    %cst_52 = arith.constant 1.000000e+00 : f32
    %cst_53 = arith.constant 0.000000e+00 : f32
    %105 = vector.broadcast %cst_52 : f32 to vector<40x8xf32>
    %106 = vector.broadcast %cst_53 : f32 to vector<40x8xf32>
    %107 = arith.select %104, %105, %106 : vector<40x8xi1>, vector<40x8xf32>
    %c680 = arith.constant 680 : index
    %c0_54 = arith.constant 0 : index
    %108 = vector.load %arg5[%c680, %c0_54] : memref<840x8xf32, #tpu.memory_space<vmem>>, vector<40x8xf32>
    tpu.vector_store %arg5[%c680, %c0_54], %107 {strides = array<i32>} : memref<840x8xf32, #tpu.memory_space<vmem>>, vector<40x8xf32>,
    %c18_i32 = arith.constant 18 : i32
    %109 = vector.broadcast %c18_i32 : i32 to vector<40x8xi32>
    %110 = arith.cmpi eq, %0, %109 : vector<40x8xi32>
    %cst_55 = arith.constant 1.000000e+00 : f32
    %cst_56 = arith.constant 0.000000e+00 : f32
    %111 = vector.broadcast %cst_55 : f32 to vector<40x8xf32>
    %112 = vector.broadcast %cst_56 : f32 to vector<40x8xf32>
    %113 = arith.select %110, %111, %112 : vector<40x8xi1>, vector<40x8xf32>
    %c720 = arith.constant 720 : index
    %c0_57 = arith.constant 0 : index
    %114 = vector.load %arg5[%c720, %c0_57] : memref<840x8xf32, #tpu.memory_space<vmem>>, vector<40x8xf32>
    tpu.vector_store %arg5[%c720, %c0_57], %113 {strides = array<i32>} : memref<840x8xf32, #tpu.memory_space<vmem>>, vector<40x8xf32>,
    %c19_i32 = arith.constant 19 : i32
    %115 = vector.broadcast %c19_i32 : i32 to vector<40x8xi32>
    %116 = arith.cmpi eq, %0, %115 : vector<40x8xi32>
    %cst_58 = arith.constant 1.000000e+00 : f32
    %cst_59 = arith.constant 0.000000e+00 : f32
    %117 = vector.broadcast %cst_58 : f32 to vector<40x8xf32>
    %118 = vector.broadcast %cst_59 : f32 to vector<40x8xf32>
    %119 = arith.select %116, %117, %118 : vector<40x8xi1>, vector<40x8xf32>
    %c760 = arith.constant 760 : index
    %c0_60 = arith.constant 0 : index
    %120 = vector.load %arg5[%c760, %c0_60] : memref<840x8xf32, #tpu.memory_space<vmem>>, vector<40x8xf32>
    tpu.vector_store %arg5[%c760, %c0_60], %119 {strides = array<i32>} : memref<840x8xf32, #tpu.memory_space<vmem>>, vector<40x8xf32>,
    %c20_i32 = arith.constant 20 : i32
    %121 = vector.broadcast %c20_i32 : i32 to vector<40x8xi32>
    %122 = arith.cmpi eq, %0, %121 : vector<40x8xi32>
    %cst_61 = arith.constant 1.000000e+00 : f32
    %cst_62 = arith.constant 0.000000e+00 : f32
    %123 = vector.broadcast %cst_61 : f32 to vector<40x8xf32>
    %124 = vector.broadcast %cst_62 : f32 to vector<40x8xf32>
    %125 = arith.select %122, %123, %124 : vector<40x8xi1>, vector<40x8xf32>
    %c800 = arith.constant 800 : index
    %c0_63 = arith.constant 0 : index
    %126 = vector.load %arg5[%c800, %c0_63] : memref<840x8xf32, #tpu.memory_space<vmem>>, vector<40x8xf32>
    tpu.vector_store %arg5[%c800, %c0_63], %125 {strides = array<i32>} : memref<840x8xf32, #tpu.memory_space<vmem>>, vector<40x8xf32>,
    %c0_64 = arith.constant 0 : index
    %c0_65 = arith.constant 0 : index
    %127 = vector.load %arg3[%c0_64, %c0_65] : memref<20x4xf32, #tpu.memory_space<vmem>>, vector<20x4xf32>
    %128 = vector.extract_strided_slice %127 {offsets = [0, 0], sizes = [20, 1], strides = [1, 1]} : vector<20x4xf32> to vector<20x1xf32>
    %129 = vector.extract_strided_slice %127 {offsets = [0, 1], sizes = [5, 1], strides = [1, 1]} : vector<20x4xf32> to vector<5x1xf32>
    %130 = vector.extract_strided_slice %127 {offsets = [0, 2], sizes = [5, 1], strides = [1, 1]} : vector<20x4xf32> to vector<5x1xf32>
    %131 = vector.extract_strided_slice %127 {offsets = [0, 3], sizes = [1, 1], strides = [1, 1]} : vector<20x4xf32> to vector<1x1xf32>
    %c0_66 = arith.constant 0 : index
    %c0_67 = arith.constant 0 : index
    %132 = vector.load %arg1[%c0_66, %c0_67] : memref<20x840xf32, #tpu.memory_space<vmem>>, vector<20x840xf32>
    %c0_68 = arith.constant 0 : index
    %c0_69 = arith.constant 0 : index
    %133 = vector.load %arg5[%c0_68, %c0_69] : memref<840x8xf32, #tpu.memory_space<vmem>>, vector<840x8xf32>
    %cst_70 = arith.constant dense<0.000000e+00> : vector<20x8xf32>
    %134 = tpu.matmul %132, %133, %cst_70 {dimension_numbers = #tpu.dot_dimension_numbers<[1], [0], [0], [1], [0, 0, 1, 1], [], []>} : vector<20x840xf32>, vector<840x8xf32>, vector<20x8xf32> -> vector<20x8xf32>
    %135 = vector.broadcast %128 : vector<20x1xf32> to vector<20x8xf32>
    %136 = arith.addf %134, %135 : vector<20x8xf32>
    %cst_71 = arith.constant 0.000000e+00 : f32
    %137 = vector.broadcast %cst_71 : f32 to vector<20x8xf32>
    %138 = arith.maximumf %136, %137 : vector<20x8xf32>
    %c0_72 = arith.constant 0 : index
    %c0_73 = arith.constant 0 : index
    %139 = vector.load %arg2[%c0_72, %c0_73] : memref<5x20xf32, #tpu.memory_space<vmem>>, vector<5x20xf32>
    %cst_74 = arith.constant dense<0.000000e+00> : vector<5x8xf32>
    %140 = tpu.matmul %139, %138, %cst_74 {dimension_numbers = #tpu.dot_dimension_numbers<[1], [0], [0], [1], [0, 0, 1, 1], [], []>} : vector<5x20xf32>, vector<20x8xf32>, vector<5x8xf32> -> vector<5x8xf32>
    %141 = vector.broadcast %129 : vector<5x1xf32> to vector<5x8xf32>
    %142 = arith.addf %140, %141 : vector<5x8xf32>
    %cst_75 = arith.constant 0.000000e+00 : f32
    %143 = vector.broadcast %cst_75 : f32 to vector<5x8xf32>
    %144 = arith.maximumf %142, %143 : vector<5x8xf32>
    %145 = vector.broadcast %130 : vector<5x1xf32> to vector<5x8xf32>
    %146 = arith.mulf %144, %145 : vector<5x8xf32>
    %cst_76 = arith.constant dense<0.000000e+00> : vector<8xf32>
    %147 = vector.multi_reduction <add>, %146, %cst_76 [0] : vector<5x8xf32> to vector<8xf32>
    %148 = vector.shape_cast %147 : vector<8xf32> to vector<1x8xf32>
    %149 = vector.broadcast %131 : vector<1x1xf32> to vector<1x8xf32>
    %150 = arith.addf %148, %149 : vector<1x8xf32>
    %c0_77 = arith.constant 0 : index
    %c0_78 = arith.constant 0 : index
    %151 = vector.load %arg4[%c0_77, %c0_78] : memref<1x8xf32, #tpu.memory_space<vmem>>, vector<1x8xf32>
    tpu.vector_store %arg4[%c0_77, %c0_78], %150 {strides = array<i32>} : memref<1x8xf32, #tpu.memory_space<vmem>>, vector<1x8xf32>,
    return
  }
}

</mosaic_0001>

<llo_original>
// kernel: model_forward.1
$region0: #{model_forward.1}
  #allocation0 [shape = 'u32[]', space=smem, size = 0x4, offset = 0x4, fixed_abs, tag = 'smem constant byte address 0x4 - core index']
  #allocation1 [shape = 'u32[144,128]{1,0:T(1,128)}', space=vmem, size = 0x12000, scoped, tag = 'internal scratch']
  #allocation2 [shape = 'f32[840,8]{1,0:T(8,128)}', space=vmem, size = 0x69000, scoped, tag = 'scratch operand']
  %s0 = inlined_call_operand.vmem [shape: s32[40,8], index: 0, kind: input, shape index: {}]
  %s1 = inlined_call_operand.hbm [shape: f32[20,840], index: 1, kind: input, shape index: {}]
  %s2 = inlined_call_operand.vmem [shape: f32[5,20], index: 2, kind: input, shape index: {}]
  %s3 = inlined_call_operand.vmem [shape: f32[20,4], index: 3, kind: input, shape index: {}]
  %s4 = inlined_call_operand.hbm [shape: f32[1,8], index: 4, kind: output, shape index: {}]
  %s5 = sld [smem:[#allocation0]]
  $region30: #{model_forward.1} parent=0
    _
  %s7 = ssub.s32 1, %s5
  %s8 = scalar_select 0, %s7, %s5
  $region1: #{model_forward.1} parent=0
    #allocation3 [shape = 'u8[86016]{0}', space=vmem, size = 0x15000, scoped, tag = 'input window, operand 1, single buffered']
    #allocation4 [shape = 's32[1]{0}', space=sflag, size = 0x4, scoped, tag = 'scoped memory for model_forward.1']
    #allocation5 [shape = 's32[1]{0}', space=sflag, size = 0x4, scoped, tag = 'scoped memory for model_forward.1']
    #allocation6 [shape = 'u8[512]{0}', space=vmem, size = 0x400, scoped, tag = 'output window, operand 0, single buffered']
    %9 = vsyncpa [#allocation4], 0
    %10 = vsyncpa [#allocation5], 0
    // Predicated region
    $region2: #{model_forward.1} parent=1 // pred_check
      _
    $region3: #{model_forward.1} parent=1 // pred_check_branch
      %12 = sbr.rel (0) target = $region5
    $region4: #{model_forward.1} parent=1 // pred_region
      _
    $region5: #{model_forward.1} parent=1 // pred_fallthru
      _
    // Predicated region
    $region6: #{model_forward.1} parent=1 // pred_check
      _
    $region7: #{model_forward.1} parent=1 // pred_check_branch
      %14 = sbr.rel (0) target = $region9
    $region8: #{model_forward.1} parent=1 // pred_region
      %s16 = ssub.s32 2688, 2688
      %17 = vsyncadd [#allocation4], %s16
      %s18 = sshll.u32 [#allocation3], 4
      %s19 = int_to_ptr.vmem [resolvable:$true] %s18
      %24 = dma.hbm_to_vmem [thread:$0]  %s1, 2688, %s19, [#allocation4], 896, 896, 56
    $region9: #{model_forward.1} parent=1 // pred_fallthru
      _
    // Predicated region
    $region10: #{model_forward.1} parent=1 // pred_check
      _
    $region11: #{model_forward.1} parent=1 // pred_check_branch
      %26 = sbr.rel (0) target = $region13
    $region12: #{model_forward.1} parent=1 // pred_region
      _
    $region13: #{model_forward.1} parent=1 // pred_fallthru
      _
    // Predicated region
    $region14: #{model_forward.1} parent=1 // pred_check
      _
    $region15: #{model_forward.1} parent=1 // pred_check_branch
      %28 = sbr.rel (0) target = $region17
    $region16: #{model_forward.1} parent=1 // pred_region
      _
    $region17: #{model_forward.1} parent=1 // pred_fallthru
      _
    // Predicated region
    $region18: #{model_forward.1} parent=1 // pred_check
      _
    $region19: #{model_forward.1} parent=1 // pred_check_branch
      %30 = sbr.rel (0) target = $region21
    $region20: #{model_forward.1} parent=1 // pred_region
      %31 = dma.done [#allocation4], 2688
    $region21: #{model_forward.1} parent=1 // pred_fallthru
      _
    %v32 = vld [vmem:[%s0] sm:$0xff]
    %v33 = vld [vmem:[%s0 + $0x8] sm:$0xff]
    %v34 = vld [vmem:[%s0 + $0x10] sm:$0xff]
    %v35 = vld [vmem:[%s0 + $0x18] sm:$0xff]
    %v36 = vld [vmem:[%s0 + $0x20] sm:$0xff]
    %vm37 = vcmp.eq.s32.totalorder %v32, 0
    %vm38 = vcmp.eq.s32.totalorder %v33, 0
    %vm39 = vcmp.eq.s32.totalorder %v34, 0
    %vm40 = vcmp.eq.s32.totalorder %v35, 0
    %vm41 = vcmp.eq.s32.totalorder %v36, 0
    %v42 = vsel %vm37, 1.0, 0.0
    %v43 = vsel %vm38, 1.0, 0.0
    %v44 = vsel %vm39, 1.0, 0.0
    %v45 = vsel %vm40, 1.0, 0.0
    %v46 = vsel %vm41, 1.0, 0.0
    %vm47 = vcmask 64512
    %48 = vst.msk [vmem:[#allocation2] sm:$0xff] %vm47, %v42
    %49 = vst.msk [vmem:[#allocation2 + $0x8] sm:$0xff] %vm47, %v43
    %50 = vst.msk [vmem:[#allocation2 + $0x10] sm:$0xff] %vm47, %v44
    %51 = vst.msk [vmem:[#allocation2 + $0x18] sm:$0xff] %vm47, %v45
    %52 = vst.msk [vmem:[#allocation2 + $0x20] sm:$0xff] %vm47, %v46
    %vm53 = vcmp.eq.s32.totalorder %v32, 1
    %vm54 = vcmp.eq.s32.totalorder %v33, 1
    %vm55 = vcmp.eq.s32.totalorder %v34, 1
    %vm56 = vcmp.eq.s32.totalorder %v35, 1
    %vm57 = vcmp.eq.s32.totalorder %v36, 1
    %v58 = vsel %vm53, 1.0, 0.0
    %v59 = vsel %vm54, 1.0, 0.0
    %v60 = vsel %vm55, 1.0, 0.0
    %v61 = vsel %vm56, 1.0, 0.0
    %v62 = vsel %vm57, 1.0, 0.0
    %63 = vst.msk [vmem:[#allocation2 + $0x28] sm:$0xff] %vm47, %v58
    %64 = vst.msk [vmem:[#allocation2 + $0x30] sm:$0xff] %vm47, %v59
    %65 = vst.msk [vmem:[#allocation2 + $0x38] sm:$0xff] %vm47, %v60
    %66 = vst.msk [vmem:[#allocation2 + $0x40] sm:$0xff] %vm47, %v61
    %67 = vst.msk [vmem:[#allocation2 + $0x48] sm:$0xff] %vm47, %v62
    %vm68 = vcmp.eq.s32.totalorder %v32, 2
    %vm69 = vcmp.eq.s32.totalorder %v33, 2
    %vm70 = vcmp.eq.s32.totalorder %v34, 2
    %vm71 = vcmp.eq.s32.totalorder %v35, 2
    %vm72 = vcmp.eq.s32.totalorder %v36, 2
    %v73 = vsel %vm68, 1.0, 0.0
    %v74 = vsel %vm69, 1.0, 0.0
    %v75 = vsel %vm70, 1.0, 0.0
    %v76 = vsel %vm71, 1.0, 0.0
    %v77 = vsel %vm72, 1.0, 0.0
    %78 = vst.msk [vmem:[#allocation2 + $0x50] sm:$0xff] %vm47, %v73
    %79 = vst.msk [vmem:[#allocation2 + $0x58] sm:$0xff] %vm47, %v74
    %80 = vst.msk [vmem:[#allocation2 + $0x60] sm:$0xff] %vm47, %v75
    %81 = vst.msk [vmem:[#allocation2 + $0x68] sm:$0xff] %vm47, %v76
    %82 = vst.msk [vmem:[#allocation2 + $0x70] sm:$0xff] %vm47, %v77
    %vm83 = vcmp.eq.s32.totalorder %v32, 3
    %vm84 = vcmp.eq.s32.totalorder %v33, 3
    %vm85 = vcmp.eq.s32.totalorder %v34, 3
    %vm86 = vcmp.eq.s32.totalorder %v35, 3
    %vm87 = vcmp.eq.s32.totalorder %v36, 3
    %v88 = vsel %vm83, 1.0, 0.0
    %v89 = vsel %vm84, 1.0, 0.0
    %v90 = vsel %vm85, 1.0, 0.0
    %v91 = vsel %vm86, 1.0, 0.0
    %v92 = vsel %vm87, 1.0, 0.0
    %93 = vst.msk [vmem:[#allocation2 + $0x78] sm:$0xff] %vm47, %v88
    %94 = vst.msk [vmem:[#allocation2 + $0x80] sm:$0xff] %vm47, %v89
    %95 = vst.msk [vmem:[#allocation2 + $0x88] sm:$0xff] %vm47, %v90
    %96 = vst.msk [vmem:[#allocation2 + $0x90] sm:$0xff] %vm47, %v91
    %97 = vst.msk [vmem:[#allocation2 + $0x98] sm:$0xff] %vm47, %v92
    %vm98 = vcmp.eq.s32.totalorder %v32, 4
    %vm99 = vcmp.eq.s32.totalorder %v33, 4
    %vm100 = vcmp.eq.s32.totalorder %v34, 4
    %vm101 = vcmp.eq.s32.totalorder %v35, 4
    %vm102 = vcmp.eq.s32.totalorder %v36, 4
    %v103 = vsel %vm98, 1.0, 0.0
    %v104 = vsel %vm99, 1.0, 0.0
    %v105 = vsel %vm100, 1.0, 0.0
    %v106 = vsel %vm101, 1.0, 0.0
    %v107 = vsel %vm102, 1.0, 0.0
    %108 = vst.msk [vmem:[#allocation2 + $0xa0] sm:$0xff] %vm47, %v103
    %109 = vst.msk [vmem:[#allocation2 + $0xa8] sm:$0xff] %vm47, %v104
    %110 = vst.msk [vmem:[#allocation2 + $0xb0] sm:$0xff] %vm47, %v105
    %111 = vst.msk [vmem:[#allocation2 + $0xb8] sm:$0xff] %vm47, %v106
    %112 = vst.msk [vmem:[#allocation2 + $0xc0] sm:$0xff] %vm47, %v107
    %vm113 = vcmp.eq.s32.totalorder %v32, 5
    %vm114 = vcmp.eq.s32.totalorder %v33, 5
    %vm115 = vcmp.eq.s32.totalorder %v34, 5
    %vm116 = vcmp.eq.s32.totalorder %v35, 5
    %vm117 = vcmp.eq.s32.totalorder %v36, 5
    %v118 = vsel %vm113, 1.0, 0.0
    %v119 = vsel %vm114, 1.0, 0.0
    %v120 = vsel %vm115, 1.0, 0.0
    %v121 = vsel %vm116, 1.0, 0.0
    %v122 = vsel %vm117, 1.0, 0.0
    %123 = vst.msk [vmem:[#allocation2 + $0xc8] sm:$0xff] %vm47, %v118
    %124 = vst.msk [vmem:[#allocation2 + $0xd0] sm:$0xff] %vm47, %v119
    %125 = vst.msk [vmem:[#allocation2 + $0xd8] sm:$0xff] %vm47, %v120
    %126 = vst.msk [vmem:[#allocation2 + $0xe0] sm:$0xff] %vm47, %v121
    %127 = vst.msk [vmem:[#allocation2 + $0xe8] sm:$0xff] %vm47, %v122
    %vm128 = vcmp.eq.s32.totalorder %v32, 6
    %vm129 = vcmp.eq.s32.totalorder %v33, 6
    %vm130 = vcmp.eq.s32.totalorder %v34, 6
    %vm131 = vcmp.eq.s32.totalorder %v35, 6
    %vm132 = vcmp.eq.s32.totalorder %v36, 6
    %v133 = vsel %vm128, 1.0, 0.0
    %v134 = vsel %vm129, 1.0, 0.0
    %v135 = vsel %vm130, 1.0, 0.0
    %v136 = vsel %vm131, 1.0, 0.0
    %v137 = vsel %vm132, 1.0, 0.0
    %138 = vst.msk [vmem:[#allocation2 + $0xf0] sm:$0xff] %vm47, %v133
    %139 = vst.msk [vmem:[#allocation2 + $0xf8] sm:$0xff] %vm47, %v134
    %140 = vst.msk [vmem:[#allocation2 + $0x100] sm:$0xff] %vm47, %v135
    %141 = vst.msk [vmem:[#allocation2 + $0x108] sm:$0xff] %vm47, %v136
    %142 = vst.msk [vmem:[#allocation2 + $0x110] sm:$0xff] %vm47, %v137
    %vm143 = vcmp.eq.s32.totalorder %v32, 7
    %vm144 = vcmp.eq.s32.totalorder %v33, 7
    %vm145 = vcmp.eq.s32.totalorder %v34, 7
    %vm146 = vcmp.eq.s32.totalorder %v35, 7
    %vm147 = vcmp.eq.s32.totalorder %v36, 7
    %v148 = vsel %vm143, 1.0, 0.0
    %v149 = vsel %vm144, 1.0, 0.0
    %v150 = vsel %vm145, 1.0, 0.0
    %v151 = vsel %vm146, 1.0, 0.0
    %v152 = vsel %vm147, 1.0, 0.0
    %153 = vst.msk [vmem:[#allocation2 + $0x118] sm:$0xff] %vm47, %v148
    %154 = vst.msk [vmem:[#allocation2 + $0x120] sm:$0xff] %vm47, %v149
    %155 = vst.msk [vmem:[#allocation2 + $0x128] sm:$0xff] %vm47, %v150
    %156 = vst.msk [vmem:[#allocation2 + $0x130] sm:$0xff] %vm47, %v151
    %157 = vst.msk [vmem:[#allocation2 + $0x138] sm:$0xff] %vm47, %v152
    %vm158 = vcmp.eq.s32.totalorder %v32, 8
    %vm159 = vcmp.eq.s32.totalorder %v33, 8
    %vm160 = vcmp.eq.s32.totalorder %v34, 8
    %vm161 = vcmp.eq.s32.totalorder %v35, 8
    %vm162 = vcmp.eq.s32.totalorder %v36, 8
    %v163 = vsel %vm158, 1.0, 0.0
    %v164 = vsel %vm159, 1.0, 0.0
    %v165 = vsel %vm160, 1.0, 0.0
    %v166 = vsel %vm161, 1.0, 0.0
    %v167 = vsel %vm162, 1.0, 0.0
    %168 = vst.msk [vmem:[#allocation2 + $0x140] sm:$0xff] %vm47, %v163
    %169 = vst.msk [vmem:[#allocation2 + $0x148] sm:$0xff] %vm47, %v164
    %170 = vst.msk [vmem:[#allocation2 + $0x150] sm:$0xff] %vm47, %v165
    %171 = vst.msk [vmem:[#allocation2 + $0x158] sm:$0xff] %vm47, %v166
    %172 = vst.msk [vmem:[#allocation2 + $0x160] sm:$0xff] %vm47, %v167
    %vm173 = vcmp.eq.s32.totalorder %v32, 9
    %vm174 = vcmp.eq.s32.totalorder %v33, 9
    %vm175 = vcmp.eq.s32.totalorder %v34, 9
    %vm176 = vcmp.eq.s32.totalorder %v35, 9
    %vm177 = vcmp.eq.s32.totalorder %v36, 9
    %v178 = vsel %vm173, 1.0, 0.0
    %v179 = vsel %vm174, 1.0, 0.0
    %v180 = vsel %vm175, 1.0, 0.0
    %v181 = vsel %vm176, 1.0, 0.0
    %v182 = vsel %vm177, 1.0, 0.0
    %183 = vst.msk [vmem:[#allocation2 + $0x168] sm:$0xff] %vm47, %v178
    %184 = vst.msk [vmem:[#allocation2 + $0x170] sm:$0xff] %vm47, %v179
    %185 = vst.msk [vmem:[#allocation2 + $0x178] sm:$0xff] %vm47, %v180
    %186 = vst.msk [vmem:[#allocation2 + $0x180] sm:$0xff] %vm47, %v181
    %187 = vst.msk [vmem:[#allocation2 + $0x188] sm:$0xff] %vm47, %v182
    %vm188 = vcmp.eq.s32.totalorder %v32, 10
    %vm189 = vcmp.eq.s32.totalorder %v33, 10
    %vm190 = vcmp.eq.s32.totalorder %v34, 10
    %vm191 = vcmp.eq.s32.totalorder %v35, 10
    %vm192 = vcmp.eq.s32.totalorder %v36, 10
    %v193 = vsel %vm188, 1.0, 0.0
    %v194 = vsel %vm189, 1.0, 0.0
    %v195 = vsel %vm190, 1.0, 0.0
    %v196 = vsel %vm191, 1.0, 0.0
    %v197 = vsel %vm192, 1.0, 0.0
    %198 = vst.msk [vmem:[#allocation2 + $0x190] sm:$0xff] %vm47, %v193
    %199 = vst.msk [vmem:[#allocation2 + $0x198] sm:$0xff] %vm47, %v194
    %200 = vst.msk [vmem:[#allocation2 + $0x1a0] sm:$0xff] %vm47, %v195
    %201 = vst.msk [vmem:[#allocation2 + $0x1a8] sm:$0xff] %vm47, %v196
    %202 = vst.msk [vmem:[#allocation2 + $0x1b0] sm:$0xff] %vm47, %v197
    %vm203 = vcmp.eq.s32.totalorder %v32, 11
    %vm204 = vcmp.eq.s32.totalorder %v33, 11
    %vm205 = vcmp.eq.s32.totalorder %v34, 11
    %vm206 = vcmp.eq.s32.totalorder %v35, 11
    %vm207 = vcmp.eq.s32.totalorder %v36, 11
    %v208 = vsel %vm203, 1.0, 0.0
    %v209 = vsel %vm204, 1.0, 0.0
    %v210 = vsel %vm205, 1.0, 0.0
    %v211 = vsel %vm206, 1.0, 0.0
    %v212 = vsel %vm207, 1.0, 0.0
    %213 = vst.msk [vmem:[#allocation2 + $0x1b8] sm:$0xff] %vm47, %v208
    %214 = vst.msk [vmem:[#allocation2 + $0x1c0] sm:$0xff] %vm47, %v209
    %215 = vst.msk [vmem:[#allocation2 + $0x1c8] sm:$0xff] %vm47, %v210
    %216 = vst.msk [vmem:[#allocation2 + $0x1d0] sm:$0xff] %vm47, %v211
    %217 = vst.msk [vmem:[#allocation2 + $0x1d8] sm:$0xff] %vm47, %v212
    %vm218 = vcmp.eq.s32.totalorder %v32, 12
    %vm219 = vcmp.eq.s32.totalorder %v33, 12
    %vm220 = vcmp.eq.s32.totalorder %v34, 12
    %vm221 = vcmp.eq.s32.totalorder %v35, 12
    %vm222 = vcmp.eq.s32.totalorder %v36, 12
    %v223 = vsel %vm218, 1.0, 0.0
    %v224 = vsel %vm219, 1.0, 0.0
    %v225 = vsel %vm220, 1.0, 0.0
    %v226 = vsel %vm221, 1.0, 0.0
    %v227 = vsel %vm222, 1.0, 0.0
    %228 = vst.msk [vmem:[#allocation2 + $0x1e0] sm:$0xff] %vm47, %v223
    %229 = vst.msk [vmem:[#allocation2 + $0x1e8] sm:$0xff] %vm47, %v224
    %230 = vst.msk [vmem:[#allocation2 + $0x1f0] sm:$0xff] %vm47, %v225
    %231 = vst.msk [vmem:[#allocation2 + $0x1f8] sm:$0xff] %vm47, %v226
    %232 = vst.msk [vmem:[#allocation2 + $0x200] sm:$0xff] %vm47, %v227
    %vm233 = vcmp.eq.s32.totalorder %v32, 13
    %vm234 = vcmp.eq.s32.totalorder %v33, 13
    %vm235 = vcmp.eq.s32.totalorder %v34, 13
    %vm236 = vcmp.eq.s32.totalorder %v35, 13
    %vm237 = vcmp.eq.s32.totalorder %v36, 13
    %v238 = vsel %vm233, 1.0, 0.0
    %v239 = vsel %vm234, 1.0, 0.0
    %v240 = vsel %vm235, 1.0, 0.0
    %v241 = vsel %vm236, 1.0, 0.0
    %v242 = vsel %vm237, 1.0, 0.0
    %243 = vst.msk [vmem:[#allocation2 + $0x208] sm:$0xff] %vm47, %v238
    %244 = vst.msk [vmem:[#allocation2 + $0x210] sm:$0xff] %vm47, %v239
    %245 = vst.msk [vmem:[#allocation2 + $0x218] sm:$0xff] %vm47, %v240
    %246 = vst.msk [vmem:[#allocation2 + $0x220] sm:$0xff] %vm47, %v241
    %247 = vst.msk [vmem:[#allocation2 + $0x228] sm:$0xff] %vm47, %v242
    %vm248 = vcmp.eq.s32.totalorder %v32, 14
    %vm249 = vcmp.eq.s32.totalorder %v33, 14
    %vm250 = vcmp.eq.s32.totalorder %v34, 14
    %vm251 = vcmp.eq.s32.totalorder %v35, 14
    %vm252 = vcmp.eq.s32.totalorder %v36, 14
    %v253 = vsel %vm248, 1.0, 0.0
    %v254 = vsel %vm249, 1.0, 0.0
    %v255 = vsel %vm250, 1.0, 0.0
    %v256 = vsel %vm251, 1.0, 0.0
    %v257 = vsel %vm252, 1.0, 0.0
    %258 = vst.msk [vmem:[#allocation2 + $0x230] sm:$0xff] %vm47, %v253
    %259 = vst.msk [vmem:[#allocation2 + $0x238] sm:$0xff] %vm47, %v254
    %260 = vst.msk [vmem:[#allocation2 + $0x240] sm:$0xff] %vm47, %v255
    %261 = vst.msk [vmem:[#allocation2 + $0x248] sm:$0xff] %vm47, %v256
    %262 = vst.msk [vmem:[#allocation2 + $0x250] sm:$0xff] %vm47, %v257
    %vm263 = vcmp.eq.s32.totalorder %v32, 15
    %vm264 = vcmp.eq.s32.totalorder %v33, 15
    %vm265 = vcmp.eq.s32.totalorder %v34, 15
    %vm266 = vcmp.eq.s32.totalorder %v35, 15
    %vm267 = vcmp.eq.s32.totalorder %v36, 15
    %v268 = vsel %vm263, 1.0, 0.0
    %v269 = vsel %vm264, 1.0, 0.0
    %v270 = vsel %vm265, 1.0, 0.0
    %v271 = vsel %vm266, 1.0, 0.0
    %v272 = vsel %vm267, 1.0, 0.0
    %273 = vst.msk [vmem:[#allocation2 + $0x258] sm:$0xff] %vm47, %v268
    %274 = vst.msk [vmem:[#allocation2 + $0x260] sm:$0xff] %vm47, %v269
    %275 = vst.msk [vmem:[#allocation2 + $0x268] sm:$0xff] %vm47, %v270
    %276 = vst.msk [vmem:[#allocation2 + $0x270] sm:$0xff] %vm47, %v271
    %277 = vst.msk [vmem:[#allocation2 + $0x278] sm:$0xff] %vm47, %v272
    %vm278 = vcmp.eq.s32.totalorder %v32, 16
    %vm279 = vcmp.eq.s32.totalorder %v33, 16
    %vm280 = vcmp.eq.s32.totalorder %v34, 16
    %vm281 = vcmp.eq.s32.totalorder %v35, 16
    %vm282 = vcmp.eq.s32.totalorder %v36, 16
    %v283 = vsel %vm278, 1.0, 0.0
    %v284 = vsel %vm279, 1.0, 0.0
    %v285 = vsel %vm280, 1.0, 0.0
    %v286 = vsel %vm281, 1.0, 0.0
    %v287 = vsel %vm282, 1.0, 0.0
    %288 = vst.msk [vmem:[#allocation2 + $0x280] sm:$0xff] %vm47, %v283
    %289 = vst.msk [vmem:[#allocation2 + $0x288] sm:$0xff] %vm47, %v284
    %290 = vst.msk [vmem:[#allocation2 + $0x290] sm:$0xff] %vm47, %v285
    %291 = vst.msk [vmem:[#allocation2 + $0x298] sm:$0xff] %vm47, %v286
    %292 = vst.msk [vmem:[#allocation2 + $0x2a0] sm:$0xff] %vm47, %v287
    %vm293 = vcmp.eq.s32.totalorder %v32, 17
    %vm294 = vcmp.eq.s32.totalorder %v33, 17
    %vm295 = vcmp.eq.s32.totalorder %v34, 17
    %vm296 = vcmp.eq.s32.totalorder %v35, 17
    %vm297 = vcmp.eq.s32.totalorder %v36, 17
    %v298 = vsel %vm293, 1.0, 0.0
    %v299 = vsel %vm294, 1.0, 0.0
    %v300 = vsel %vm295, 1.0, 0.0
    %v301 = vsel %vm296, 1.0, 0.0
    %v302 = vsel %vm297, 1.0, 0.0
    %303 = vst.msk [vmem:[#allocation2 + $0x2a8] sm:$0xff] %vm47, %v298
    %304 = vst.msk [vmem:[#allocation2 + $0x2b0] sm:$0xff] %vm47, %v299
    %305 = vst.msk [vmem:[#allocation2 + $0x2b8] sm:$0xff] %vm47, %v300
    %306 = vst.msk [vmem:[#allocation2 + $0x2c0] sm:$0xff] %vm47, %v301
    %307 = vst.msk [vmem:[#allocation2 + $0x2c8] sm:$0xff] %vm47, %v302
    %vm308 = vcmp.eq.s32.totalorder %v32, 18
    %vm309 = vcmp.eq.s32.totalorder %v33, 18
    %vm310 = vcmp.eq.s32.totalorder %v34, 18
    %vm311 = vcmp.eq.s32.totalorder %v35, 18
    %vm312 = vcmp.eq.s32.totalorder %v36, 18
    %v313 = vsel %vm308, 1.0, 0.0
    %v314 = vsel %vm309, 1.0, 0.0
    %v315 = vsel %vm310, 1.0, 0.0
    %v316 = vsel %vm311, 1.0, 0.0
    %v317 = vsel %vm312, 1.0, 0.0
    %318 = vst.msk [vmem:[#allocation2 + $0x2d0] sm:$0xff] %vm47, %v313
    %319 = vst.msk [vmem:[#allocation2 + $0x2d8] sm:$0xff] %vm47, %v314
    %320 = vst.msk [vmem:[#allocation2 + $0x2e0] sm:$0xff] %vm47, %v315
    %321 = vst.msk [vmem:[#allocation2 + $0x2e8] sm:$0xff] %vm47, %v316
    %322 = vst.msk [vmem:[#allocation2 + $0x2f0] sm:$0xff] %vm47, %v317
    %vm323 = vcmp.eq.s32.totalorder %v32, 19
    %vm324 = vcmp.eq.s32.totalorder %v33, 19
    %vm325 = vcmp.eq.s32.totalorder %v34, 19
    %vm326 = vcmp.eq.s32.totalorder %v35, 19
    %vm327 = vcmp.eq.s32.totalorder %v36, 19
    %v328 = vsel %vm323, 1.0, 0.0
    %v329 = vsel %vm324, 1.0, 0.0
    %v330 = vsel %vm325, 1.0, 0.0
    %v331 = vsel %vm326, 1.0, 0.0
    %v332 = vsel %vm327, 1.0, 0.0
    %333 = vst.msk [vmem:[#allocation2 + $0x2f8] sm:$0xff] %vm47, %v328
    %334 = vst.msk [vmem:[#allocation2 + $0x300] sm:$0xff] %vm47, %v329
    %335 = vst.msk [vmem:[#allocation2 + $0x308] sm:$0xff] %vm47, %v330
    %336 = vst.msk [vmem:[#allocation2 + $0x310] sm:$0xff] %vm47, %v331
    %337 = vst.msk [vmem:[#allocation2 + $0x318] sm:$0xff] %vm47, %v332
    %vm338 = vcmp.eq.s32.totalorder %v32, 20
    %vm339 = vcmp.eq.s32.totalorder %v33, 20
    %vm340 = vcmp.eq.s32.totalorder %v34, 20
    %vm341 = vcmp.eq.s32.totalorder %v35, 20
    %vm342 = vcmp.eq.s32.totalorder %v36, 20
    %v343 = vsel %vm338, 1.0, 0.0
    %v344 = vsel %vm339, 1.0, 0.0
    %v345 = vsel %vm340, 1.0, 0.0
    %v346 = vsel %vm341, 1.0, 0.0
    %v347 = vsel %vm342, 1.0, 0.0
    %348 = vst.msk [vmem:[#allocation2 + $0x320] sm:$0xff] %vm47, %v343
    %349 = vst.msk [vmem:[#allocation2 + $0x328] sm:$0xff] %vm47, %v344
    %350 = vst.msk [vmem:[#allocation2 + $0x330] sm:$0xff] %vm47, %v345
    %351 = vst.msk [vmem:[#allocation2 + $0x338] sm:$0xff] %vm47, %v346
    %352 = vst.msk [vmem:[#allocation2 + $0x340] sm:$0xff] %vm47, %v347
    %v353 = vld [vmem:[%s3] sm:$0xff]
    %v354 = vld [vmem:[%s3 + $0x8] sm:$0xff]
    %v355 = vld [vmem:[%s3 + $0x10] sm:$0xf]
    %v356 = vld [vmem:[#allocation3] sm:$0xff]
    %v357 = vld [vmem:[#allocation3 + $0x8] sm:$0xff]
    %v358 = vld [vmem:[#allocation3 + $0x10] sm:$0xff]
    %v359 = vld [vmem:[#allocation3 + $0x18] sm:$0xff]
    %v360 = vld [vmem:[#allocation3 + $0x20] sm:$0xff]
    %v361 = vld [vmem:[#allocation3 + $0x28] sm:$0xff]
    %v362 = vld [vmem:[#allocation3 + $0x30] sm:$0xff]
    %v363 = vld [vmem:[#allocation3 + $0x38] sm:$0xff]
    %v364 = vld [vmem:[#allocation3 + $0x40] sm:$0xff]
    %v365 = vld [vmem:[#allocation3 + $0x48] sm:$0xff]
    %v366 = vld [vmem:[#allocation3 + $0x50] sm:$0xff]
    %v367 = vld [vmem:[#allocation3 + $0x58] sm:$0xff]
    %v368 = vld [vmem:[#allocation3 + $0x60] sm:$0xff]
    %v369 = vld [vmem:[#allocation3 + $0x68] sm:$0xff]
    %v370 = vld [vmem:[#allocation3 + $0x70] sm:$0xf]
    %v371 = vld [vmem:[#allocation3 + $0x78] sm:$0xf]
    %v372 = vld [vmem:[#allocation3 + $0x80] sm:$0xf]
    %v373 = vld [vmem:[#allocation3 + $0x88] sm:$0xf]
    %v374 = vld [vmem:[#allocation3 + $0x90] sm:$0xf]
    %v375 = vld [vmem:[#allocation3 + $0x98] sm:$0xf]
    %v376 = vld [vmem:[#allocation3 + $0xa0] sm:$0xf]
    %v377 = vld [vmem:[#allocation2] sm:$0xff]
    %v378 = vld [vmem:[#allocation2 + $0x8] sm:$0xff]
    %v379 = vld [vmem:[#allocation2 + $0x10] sm:$0xff]
    %v380 = vld [vmem:[#allocation2 + $0x18] sm:$0xff]
    %v381 = vld [vmem:[#allocation2 + $0x20] sm:$0xff]
    %v382 = vld [vmem:[#allocation2 + $0x28] sm:$0xff]
    %v383 = vld [vmem:[#allocation2 + $0x30] sm:$0xff]
    %v384 = vld [vmem:[#allocation2 + $0x38] sm:$0xff]
    %v385 = vld [vmem:[#allocation2 + $0x40] sm:$0xff]
    %v386 = vld [vmem:[#allocation2 + $0x48] sm:$0xff]
    %v387 = vld [vmem:[#allocation2 + $0x50] sm:$0xff]
    %v388 = vld [vmem:[#allocation2 + $0x58] sm:$0xff]
    %v389 = vld [vmem:[#allocation2 + $0x60] sm:$0xff]
    %v390 = vld [vmem:[#allocation2 + $0x68] sm:$0xff]
    %v391 = vld [vmem:[#allocation2 + $0x70] sm:$0xff]
    %v392 = vld [vmem:[#allocation2 + $0x78] sm:$0xff]
    %v393 = vld [vmem:[#allocation2 + $0x80] sm:$0xff]
    %v394 = vld [vmem:[#allocation2 + $0x88] sm:$0xff]
    %v395 = vld [vmem:[#allocation2 + $0x90] sm:$0xff]
    %v396 = vld [vmem:[#allocation2 + $0x98] sm:$0xff]
    %v397 = vld [vmem:[#allocation2 + $0xa0] sm:$0xff]
    %v398 = vld [vmem:[#allocation2 + $0xa8] sm:$0xff]
    %v399 = vld [vmem:[#allocation2 + $0xb0] sm:$0xff]
    %v400 = vld [vmem:[#allocation2 + $0xb8] sm:$0xff]
    %v401 = vld [vmem:[#allocation2 + $0xc0] sm:$0xff]
    %v402 = vld [vmem:[#allocation2 + $0xc8] sm:$0xff]
    %v403 = vld [vmem:[#allocation2 + $0xd0] sm:$0xff]
    %v404 = vld [vmem:[#allocation2 + $0xd8] sm:$0xff]
    %v405 = vld [vmem:[#allocation2 + $0xe0] sm:$0xff]
    %v406 = vld [vmem:[#allocation2 + $0xe8] sm:$0xff]
    %v407 = vld [vmem:[#allocation2 + $0xf0] sm:$0xff]
    %v408 = vld [vmem:[#allocation2 + $0xf8] sm:$0xff]
    %v409 = vld [vmem:[#allocation2 + $0x100] sm:$0xff]
    %v410 = vld [vmem:[#allocation2 + $0x108] sm:$0xff]
    %v411 = vld [vmem:[#allocation2 + $0x110] sm:$0xff]
    %v412 = vld [vmem:[#allocation2 + $0x118] sm:$0xff]
    %v413 = vld [vmem:[#allocation2 + $0x120] sm:$0xff]
    %v414 = vld [vmem:[#allocation2 + $0x128] sm:$0xff]
    %v415 = vld [vmem:[#allocation2 + $0x130] sm:$0xff]
    %v416 = vld [vmem:[#allocation2 + $0x138] sm:$0xff]
    %v417 = vld [vmem:[#allocation2 + $0x140] sm:$0xff]
    %v418 = vld [vmem:[#allocation2 + $0x148] sm:$0xff]
    %v419 = vld [vmem:[#allocation2 + $0x150] sm:$0xff]
    %v420 = vld [vmem:[#allocation2 + $0x158] sm:$0xff]
    %v421 = vld [vmem:[#allocation2 + $0x160] sm:$0xff]
    %v422 = vld [vmem:[#allocation2 + $0x168] sm:$0xff]
    %v423 = vld [vmem:[#allocation2 + $0x170] sm:$0xff]
    %v424 = vld [vmem:[#allocation2 + $0x178] sm:$0xff]
    %v425 = vld [vmem:[#allocation2 + $0x180] sm:$0xff]
    %v426 = vld [vmem:[#allocation2 + $0x188] sm:$0xff]
    %v427 = vld [vmem:[#allocation2 + $0x190] sm:$0xff]
    %v428 = vld [vmem:[#allocation2 + $0x198] sm:$0xff]
    %v429 = vld [vmem:[#allocation2 + $0x1a0] sm:$0xff]
    %v430 = vld [vmem:[#allocation2 + $0x1a8] sm:$0xff]
    %v431 = vld [vmem:[#allocation2 + $0x1b0] sm:$0xff]
    %v432 = vld [vmem:[#allocation2 + $0x1b8] sm:$0xff]
    %v433 = vld [vmem:[#allocation2 + $0x1c0] sm:$0xff]
    %v434 = vld [vmem:[#allocation2 + $0x1c8] sm:$0xff]
    %v435 = vld [vmem:[#allocation2 + $0x1d0] sm:$0xff]
    %v436 = vld [vmem:[#allocation2 + $0x1d8] sm:$0xff]
    %v437 = vld [vmem:[#allocation2 + $0x1e0] sm:$0xff]
    %v438 = vld [vmem:[#allocation2 + $0x1e8] sm:$0xff]
    %v439 = vld [vmem:[#allocation2 + $0x1f0] sm:$0xff]
    %v440 = vld [vmem:[#allocation2 + $0x1f8] sm:$0xff]
    %v441 = vld [vmem:[#allocation2 + $0x200] sm:$0xff]
    %v442 = vld [vmem:[#allocation2 + $0x208] sm:$0xff]
    %v443 = vld [vmem:[#allocation2 + $0x210] sm:$0xff]
    %v444 = vld [vmem:[#allocation2 + $0x218] sm:$0xff]
    %v445 = vld [vmem:[#allocation2 + $0x220] sm:$0xff]
    %v446 = vld [vmem:[#allocation2 + $0x228] sm:$0xff]
    %v447 = vld [vmem:[#allocation2 + $0x230] sm:$0xff]
    %v448 = vld [vmem:[#allocation2 + $0x238] sm:$0xff]
    %v449 = vld [vmem:[#allocation2 + $0x240] sm:$0xff]
    %v450 = vld [vmem:[#allocation2 + $0x248] sm:$0xff]
    %v451 = vld [vmem:[#allocation2 + $0x250] sm:$0xff]
    %v452 = vld [vmem:[#allocation2 + $0x258] sm:$0xff]
    %v453 = vld [vmem:[#allocation2 + $0x260] sm:$0xff]
    %v454 = vld [vmem:[#allocation2 + $0x268] sm:$0xff]
    %v455 = vld [vmem:[#allocation2 + $0x270] sm:$0xff]
    %v456 = vld [vmem:[#allocation2 + $0x278] sm:$0xff]
    %v457 = vld [vmem:[#allocation2 + $0x280] sm:$0xff]
    %v458 = vld [vmem:[#allocation2 + $0x288] sm:$0xff]
    %v459 = vld [vmem:[#allocation2 + $0x290] sm:$0xff]
    %v460 = vld [vmem:[#allocation2 + $0x298] sm:$0xff]
    %v461 = vld [vmem:[#allocation2 + $0x2a0] sm:$0xff]
    %v462 = vld [vmem:[#allocation2 + $0x2a8] sm:$0xff]
    %v463 = vld [vmem:[#allocation2 + $0x2b0] sm:$0xff]
    %v464 = vld [vmem:[#allocation2 + $0x2b8] sm:$0xff]
    %v465 = vld [vmem:[#allocation2 + $0x2c0] sm:$0xff]
    %v466 = vld [vmem:[#allocation2 + $0x2c8] sm:$0xff]
    %v467 = vld [vmem:[#allocation2 + $0x2d0] sm:$0xff]
    %v468 = vld [vmem:[#allocation2 + $0x2d8] sm:$0xff]
    %v469 = vld [vmem:[#allocation2 + $0x2e0] sm:$0xff]
    %v470 = vld [vmem:[#allocation2 + $0x2e8] sm:$0xff]
    %v471 = vld [vmem:[#allocation2 + $0x2f0] sm:$0xff]
    %v472 = vld [vmem:[#allocation2 + $0x2f8] sm:$0xff]
    %v473 = vld [vmem:[#allocation2 + $0x300] sm:$0xff]
    %v474 = vld [vmem:[#allocation2 + $0x308] sm:$0xff]
    %v475 = vld [vmem:[#allocation2 + $0x310] sm:$0xff]
    %v476 = vld [vmem:[#allocation2 + $0x318] sm:$0xff]
    %v477 = vld [vmem:[#allocation2 + $0x320] sm:$0xff]
    %v478 = vld [vmem:[#allocation2 + $0x328] sm:$0xff]
    %v479 = vld [vmem:[#allocation2 + $0x330] sm:$0xff]
    %v480 = vld [vmem:[#allocation2 + $0x338] sm:$0xff]
    %v481 = vld [vmem:[#allocation2 + $0x340] sm:$0xff]
    %483 = vset.pattern.permute.xlu0 0
    %484 = vperm.xlu0 %483, %v353
    %v485 = vpop.permute.xlu0 %484
    %488 = vset.pattern.permute.xlu0 0
    %489 = vperm.xlu0 %488, %v354
    %v490 = vpop.permute.xlu0 %489
    %493 = vset.pattern.permute.xlu0 0
    %494 = vperm.xlu0 %493, %v355
    %v495 = vpop.permute.xlu0 %494
    %vm497 = vcmask 588800
    %v499 = vsel %vm497, %v362, 0
    %v502 = vsel %vm497, %v369, 0
    %v505 = vsel %vm497, %v376, 0
    %507 = vmatprep.subr.mxu0 0.0
    %508 = vmatpush1.msra.mxu0 %v392
    %509 = vmatprep.subr.mxu0 0.0
    %510 = vmatpush1.msra.mxu0 %v391
    %511 = vmatprep.subr.mxu0 0.0
    %512 = vmatpush1.msra.mxu0 %v390
    %513 = vmatprep.subr.mxu0 0.0
    %514 = vmatpush1.msra.mxu0 %v389
    %515 = vmatprep.subr.mxu0 0.0
    %516 = vmatpush1.msra.mxu0 %v388
    %517 = vmatprep.subr.mxu0 0.0
    %518 = vmatpush1.msra.mxu0 %v387
    %519 = vmatprep.subr.mxu0 0.0
    %520 = vmatpush1.msra.mxu0 %v386
    %521 = vmatprep.subr.mxu0 0.0
    %522 = vmatpush1.msra.mxu0 %v385
    %523 = vmatprep.subr.mxu0 0.0
    %524 = vmatpush1.msra.mxu0 %v384
    %525 = vmatprep.subr.mxu0 0.0
    %526 = vmatpush1.msra.mxu0 %v383
    %527 = vmatprep.subr.mxu0 0.0
    %528 = vmatpush1.msra.mxu0 %v382
    %529 = vmatprep.subr.mxu0 0.0
    %530 = vmatpush1.msra.mxu0 %v381
    %531 = vmatprep.subr.mxu0 0.0
    %532 = vmatpush1.msra.mxu0 %v380
    %533 = vmatprep.subr.mxu0 0.0
    %534 = vmatpush1.msra.mxu0 %v379
    %535 = vmatprep.subr.mxu0 0.0
    %536 = vmatpush1.msra.mxu0 %v378
    %537 = vmatprep.subr.mxu0 0.0
    %538 = vmatpush1.msra.mxu0 %v377
    %539 = vmatprep.subr.mxu0 0.0
    %540 = vmatpush2.msra.mxu0 %v408
    %541 = vmatprep.subr.mxu0 0.0
    %542 = vmatpush2.msra.mxu0 %v407
    %543 = vmatprep.subr.mxu0 0.0
    %544 = vmatpush2.msra.mxu0 %v406
    %545 = vmatprep.subr.mxu0 0.0
    %546 = vmatpush2.msra.mxu0 %v405
    %547 = vmatprep.subr.mxu0 0.0
    %548 = vmatpush2.msra.mxu0 %v404
    %549 = vmatprep.subr.mxu0 0.0
    %550 = vmatpush2.msra.mxu0 %v403
    %551 = vmatprep.subr.mxu0 0.0
    %552 = vmatpush2.msra.mxu0 %v402
    %553 = vmatprep.subr.mxu0 0.0
    %554 = vmatpush2.msra.mxu0 %v401
    %555 = vmatprep.subr.mxu0 0.0
    %556 = vmatpush2.msra.mxu0 %v400
    %557 = vmatprep.subr.mxu0 0.0
    %558 = vmatpush2.msra.mxu0 %v399
    %559 = vmatprep.subr.mxu0 0.0
    %560 = vmatpush2.msra.mxu0 %v398
    %561 = vmatprep.subr.mxu0 0.0
    %562 = vmatpush2.msra.mxu0 %v397
    %563 = vmatprep.subr.mxu0 0.0
    %564 = vmatpush2.msra.mxu0 %v396
    %565 = vmatprep.subr.mxu0 0.0
    %566 = vmatpush2.msra.mxu0 %v395
    %567 = vmatprep.subr.mxu0 0.0
    %568 = vmatpush2.msra.mxu0 %v394
    %569 = vmatprep.subr.mxu0 0.0
    %570 = vmatpush2.msra.mxu0 %v393
    %571 = vmatprep.mubr.f32.mxu0 %v357
    %572 = vmatmul.mubr.f32.gmra.mxu0 %v356
    %v573 = vpop.f32.mrf.mxu0
    %v574 = vadd.f32 %v485, %v573
    %v575 = vpop.f32.mrf.mxu0
    %576 = vmatprep.mubr.f32.mxu0 %v364
    %577 = vmatmul.mubr.f32.gmra.mxu0 %v363
    %v578 = vpop.f32.mrf.mxu0
    %v579 = vadd.f32 %v490, %v578
    %v580 = vpop.f32.mrf.mxu0
    %581 = vmatprep.mubr.f32.mxu0 %v371
    %582 = vmatmul.mubr.f32.gmra.mxu0 %v370
    %v583 = vpop.f32.mrf.mxu0
    %v584 = vadd.f32 %v495, %v583
    %v585 = vpop.f32.mrf.mxu0
    %586 = vdwg.mxu0
    %587 = vmatprep.subr.mxu0 0.0
    %588 = vmatpush1.msra.mxu0 %v424
    %589 = vmatprep.subr.mxu0 0.0
    %590 = vmatpush1.msra.mxu0 %v423
    %591 = vmatprep.subr.mxu0 0.0
    %592 = vmatpush1.msra.mxu0 %v422
    %593 = vmatprep.subr.mxu0 0.0
    %594 = vmatpush1.msra.mxu0 %v421
    %595 = vmatprep.subr.mxu0 0.0
    %596 = vmatpush1.msra.mxu0 %v420
    %597 = vmatprep.subr.mxu0 0.0
    %598 = vmatpush1.msra.mxu0 %v419
    %599 = vmatprep.subr.mxu0 0.0
    %600 = vmatpush1.msra.mxu0 %v418
    %601 = vmatprep.subr.mxu0 0.0
    %602 = vmatpush1.msra.mxu0 %v417
    %603 = vmatprep.subr.mxu0 0.0
    %604 = vmatpush1.msra.mxu0 %v416
    %605 = vmatprep.subr.mxu0 0.0
    %606 = vmatpush1.msra.mxu0 %v415
    %607 = vmatprep.subr.mxu0 0.0
    %608 = vmatpush1.msra.mxu0 %v414
    %609 = vmatprep.subr.mxu0 0.0
    %610 = vmatpush1.msra.mxu0 %v413
    %611 = vmatprep.subr.mxu0 0.0
    %612 = vmatpush1.msra.mxu0 %v412
    %613 = vmatprep.subr.mxu0 0.0
    %614 = vmatpush1.msra.mxu0 %v411
    %615 = vmatprep.subr.mxu0 0.0
    %616 = vmatpush1.msra.mxu0 %v410
    %617 = vmatprep.subr.mxu0 0.0
    %618 = vmatpush1.msra.mxu0 %v409
    %619 = vmatprep.subr.mxu0 0.0
    %620 = vmatpush2.msra.mxu0 %v440
    %621 = vmatprep.subr.mxu0 0.0
    %622 = vmatpush2.msra.mxu0 %v439
    %623 = vmatprep.subr.mxu0 0.0
    %624 = vmatpush2.msra.mxu0 %v438
    %625 = vmatprep.subr.mxu0 0.0
    %626 = vmatpush2.msra.mxu0 %v437
    %627 = vmatprep.subr.mxu0 0.0
    %628 = vmatpush2.msra.mxu0 %v436
    %629 = vmatprep.subr.mxu0 0.0
    %630 = vmatpush2.msra.mxu0 %v435
    %631 = vmatprep.subr.mxu0 0.0
    %632 = vmatpush2.msra.mxu0 %v434
    %633 = vmatprep.subr.mxu0 0.0
    %634 = vmatpush2.msra.mxu0 %v433
    %635 = vmatprep.subr.mxu0 0.0
    %636 = vmatpush2.msra.mxu0 %v432
    %637 = vmatprep.subr.mxu0 0.0
    %638 = vmatpush2.msra.mxu0 %v431
    %639 = vmatprep.subr.mxu0 0.0
    %640 = vmatpush2.msra.mxu0 %v430
    %641 = vmatprep.subr.mxu0 0.0
    %642 = vmatpush2.msra.mxu0 %v429
    %643 = vmatprep.subr.mxu0 0.0
    %644 = vmatpush2.msra.mxu0 %v428
    %645 = vmatprep.subr.mxu0 0.0
    %646 = vmatpush2.msra.mxu0 %v427
    %647 = vmatprep.subr.mxu0 0.0
    %648 = vmatpush2.msra.mxu0 %v426
    %649 = vmatprep.subr.mxu0 0.0
    %650 = vmatpush2.msra.mxu0 %v425
    %651 = vmatprep.mubr.f32.mxu0 %v359
    %652 = vmatmul.mubr.f32.gmra.mxu0 %v358
    %v653 = vpop.f32.mrf.mxu0
    %v654 = vadd.f32 %v574, %v653
    %v655 = vpop.f32.mrf.mxu0
    %656 = vmatprep.mubr.f32.mxu0 %v366
    %657 = vmatmul.mubr.f32.gmra.mxu0 %v365
    %v658 = vpop.f32.mrf.mxu0
    %v659 = vadd.f32 %v579, %v658
    %v660 = vpop.f32.mrf.mxu0
    %661 = vmatprep.mubr.f32.mxu0 %v373
    %662 = vmatmul.mubr.f32.gmra.mxu0 %v372
    %v663 = vpop.f32.mrf.mxu0
    %v664 = vadd.f32 %v584, %v663
    %v665 = vpop.f32.mrf.mxu0
    %666 = vdwg.mxu0
    %667 = vmatprep.subr.mxu0 0.0
    %668 = vmatpush1.msra.mxu0 %v456
    %669 = vmatprep.subr.mxu0 0.0
    %670 = vmatpush1.msra.mxu0 %v455
    %671 = vmatprep.subr.mxu0 0.0
    %672 = vmatpush1.msra.mxu0 %v454
    %673 = vmatprep.subr.mxu0 0.0
    %674 = vmatpush1.msra.mxu0 %v453
    %675 = vmatprep.subr.mxu0 0.0
    %676 = vmatpush1.msra.mxu0 %v452
    %677 = vmatprep.subr.mxu0 0.0
    %678 = vmatpush1.msra.mxu0 %v451
    %679 = vmatprep.subr.mxu0 0.0
    %680 = vmatpush1.msra.mxu0 %v450
    %681 = vmatprep.subr.mxu0 0.0
    %682 = vmatpush1.msra.mxu0 %v449
    %683 = vmatprep.subr.mxu0 0.0
    %684 = vmatpush1.msra.mxu0 %v448
    %685 = vmatprep.subr.mxu0 0.0
    %686 = vmatpush1.msra.mxu0 %v447
    %687 = vmatprep.subr.mxu0 0.0
    %688 = vmatpush1.msra.mxu0 %v446
    %689 = vmatprep.subr.mxu0 0.0
    %690 = vmatpush1.msra.mxu0 %v445
    %691 = vmatprep.subr.mxu0 0.0
    %692 = vmatpush1.msra.mxu0 %v444
    %693 = vmatprep.subr.mxu0 0.0
    %694 = vmatpush1.msra.mxu0 %v443
    %695 = vmatprep.subr.mxu0 0.0
    %696 = vmatpush1.msra.mxu0 %v442
    %697 = vmatprep.subr.mxu0 0.0
    %698 = vmatpush1.msra.mxu0 %v441
    %699 = vmatprep.subr.mxu0 0.0
    %700 = vmatpush2.msra.mxu0 %v472
    %701 = vmatprep.subr.mxu0 0.0
    %702 = vmatpush2.msra.mxu0 %v471
    %703 = vmatprep.subr.mxu0 0.0
    %704 = vmatpush2.msra.mxu0 %v470
    %705 = vmatprep.subr.mxu0 0.0
    %706 = vmatpush2.msra.mxu0 %v469
    %707 = vmatprep.subr.mxu0 0.0
    %708 = vmatpush2.msra.mxu0 %v468
    %709 = vmatprep.subr.mxu0 0.0
    %710 = vmatpush2.msra.mxu0 %v467
    %711 = vmatprep.subr.mxu0 0.0
    %712 = vmatpush2.msra.mxu0 %v466
    %713 = vmatprep.subr.mxu0 0.0
    %714 = vmatpush2.msra.mxu0 %v465
    %715 = vmatprep.subr.mxu0 0.0
    %716 = vmatpush2.msra.mxu0 %v464
    %717 = vmatprep.subr.mxu0 0.0
    %718 = vmatpush2.msra.mxu0 %v463
    %719 = vmatprep.subr.mxu0 0.0
    %720 = vmatpush2.msra.mxu0 %v462
    %721 = vmatprep.subr.mxu0 0.0
    %722 = vmatpush2.msra.mxu0 %v461
    %723 = vmatprep.subr.mxu0 0.0
    %724 = vmatpush2.msra.mxu0 %v460
    %725 = vmatprep.subr.mxu0 0.0
    %726 = vmatpush2.msra.mxu0 %v459
    %727 = vmatprep.subr.mxu0 0.0
    %728 = vmatpush2.msra.mxu0 %v458
    %729 = vmatprep.subr.mxu0 0.0
    %730 = vmatpush2.msra.mxu0 %v457
    %731 = vmatprep.mubr.f32.mxu0 %v361
    %732 = vmatmul.mubr.f32.gmra.mxu0 %v360
    %v733 = vpop.f32.mrf.mxu0
    %v734 = vadd.f32 %v654, %v733
    %v735 = vpop.f32.mrf.mxu0
    %736 = vmatprep.mubr.f32.mxu0 %v368
    %737 = vmatmul.mubr.f32.gmra.mxu0 %v367
    %v738 = vpop.f32.mrf.mxu0
    %v739 = vadd.f32 %v659, %v738
    %v740 = vpop.f32.mrf.mxu0
    %741 = vmatprep.mubr.f32.mxu0 %v375
    %742 = vmatmul.mubr.f32.gmra.mxu0 %v374
    %v743 = vpop.f32.mrf.mxu0
    %v744 = vadd.f32 %v664, %v743
    %v745 = vpop.f32.mrf.mxu0
    %746 = vdwg.mxu0
    %747 = vmatprep.subr.mxu0 0.0
    %748 = vmatpush1.msra.mxu0 0.0
    %749 = vmatprep.subr.mxu0 0.0
    %750 = vmatpush1.msra.mxu0 0.0
    %751 = vmatprep.subr.mxu0 0.0
    %752 = vmatpush1.msra.mxu0 0.0
    %753 = vmatprep.subr.mxu0 0.0
    %754 = vmatpush1.msra.mxu0 0.0
    %755 = vmatprep.subr.mxu0 0.0
    %756 = vmatpush1.msra.mxu0 0.0
    %757 = vmatprep.subr.mxu0 0.0
    %758 = vmatpush1.msra.mxu0 0.0
    %759 = vmatprep.subr.mxu0 0.0
    %760 = vmatpush1.msra.mxu0 0.0
    %761 = vmatprep.subr.mxu0 0.0
    %762 = vmatpush1.msra.mxu0 %v481
    %763 = vmatprep.subr.mxu0 0.0
    %764 = vmatpush1.msra.mxu0 %v480
    %765 = vmatprep.subr.mxu0 0.0
    %766 = vmatpush1.msra.mxu0 %v479
    %767 = vmatprep.subr.mxu0 0.0
    %768 = vmatpush1.msra.mxu0 %v478
    %769 = vmatprep.subr.mxu0 0.0
    %770 = vmatpush1.msra.mxu0 %v477
    %771 = vmatprep.subr.mxu0 0.0
    %772 = vmatpush1.msra.mxu0 %v476
    %773 = vmatprep.subr.mxu0 0.0
    %774 = vmatpush1.msra.mxu0 %v475
    %775 = vmatprep.subr.mxu0 0.0
    %776 = vmatpush1.msra.mxu0 %v474
    %777 = vmatprep.subr.mxu0 0.0
    %778 = vmatpush1.msra.mxu0 %v473
    %779 = vmatprep.subr.mxu0 0.0
    %780 = vmatpush2.msra.mxu0 0.0
    %781 = vmatprep.subr.mxu0 0.0
    %782 = vmatpush2.msra.mxu0 0.0
    %783 = vmatprep.subr.mxu0 0.0
    %784 = vmatpush2.msra.mxu0 0.0
    %785 = vmatprep.subr.mxu0 0.0
    %786 = vmatpush2.msra.mxu0 0.0
    %787 = vmatprep.subr.mxu0 0.0
    %788 = vmatpush2.msra.mxu0 0.0
    %789 = vmatprep.subr.mxu0 0.0
    %790 = vmatpush2.msra.mxu0 0.0
    %791 = vmatprep.subr.mxu0 0.0
    %792 = vmatpush2.msra.mxu0 0.0
    %793 = vmatprep.subr.mxu0 0.0
    %794 = vmatpush2.msra.mxu0 0.0
    %795 = vmatprep.subr.mxu0 0.0
    %796 = vmatpush2.msra.mxu0 0.0
    %797 = vmatprep.subr.mxu0 0.0
    %798 = vmatpush2.msra.mxu0 0.0
    %799 = vmatprep.subr.mxu0 0.0
    %800 = vmatpush2.msra.mxu0 0.0
    %801 = vmatprep.subr.mxu0 0.0
    %802 = vmatpush2.msra.mxu0 0.0
    %803 = vmatprep.subr.mxu0 0.0
    %804 = vmatpush2.msra.mxu0 0.0
    %805 = vmatprep.subr.mxu0 0.0
    %806 = vmatpush2.msra.mxu0 0.0
    %807 = vmatprep.subr.mxu0 0.0
    %808 = vmatpush2.msra.mxu0 0.0
    %809 = vmatprep.subr.mxu0 0.0
    %810 = vmatpush2.msra.mxu0 0.0
    %811 = vmatprep.mubr.f32.mxu0 0.0
    %812 = vmatmul.mubr.f32.gmra.mxu0 %v499
    %v813 = vpop.f32.mrf.mxu0
    %v814 = vadd.f32 %v734, %v813
    %v815 = vpop.f32.mrf.mxu0
    %816 = vmatprep.mubr.f32.mxu0 0.0
    %817 = vmatmul.mubr.f32.gmra.mxu0 %v502
    %v818 = vpop.f32.mrf.mxu0
    %v819 = vadd.f32 %v739, %v818
    %v820 = vpop.f32.mrf.mxu0
    %821 = vmatprep.mubr.f32.mxu0 0.0
    %822 = vmatmul.mubr.f32.gmra.mxu0 %v505
    %v823 = vpop.f32.mrf.mxu0
    %v824 = vadd.f32 %v744, %v823
    %v825 = vpop.f32.mrf.mxu0
    %826 = vdwg.mxu0
    %v827 = vmax.f32 %v814, 0.0
    %v828 = vmax.f32 %v819, 0.0
    %v829 = vmax.f32 %v824, 0.0
    %v830 = vld [vmem:[%s2] sm:$0x1f]
    %831 = vset.pattern.permute.xlu0 1
    %832 = vperm.xlu0 %831, %v353
    %v833 = vpop.permute.xlu0 %832
    %vm835 = vcmask 162816
    %v837 = vsel %vm835, %v830, 0
    %vm839 = vcmask 1043456
    %v841 = vsel %vm839, %v829, 0
    %843 = vmatprep.subr.mxu0 0.0
    %844 = vmatpush1.msra.mxu0 0.0
    %845 = vmatprep.subr.mxu0 0.0
    %846 = vmatpush1.msra.mxu0 0.0
    %847 = vmatprep.subr.mxu0 0.0
    %848 = vmatpush1.msra.mxu0 0.0
    %849 = vmatprep.subr.mxu0 0.0
    %850 = vmatpush1.msra.mxu0 0.0
    %851 = vmatprep.subr.mxu0 0.0
    %852 = vmatpush1.msra.mxu0 0.0
    %853 = vmatprep.subr.mxu0 0.0
    %854 = vmatpush1.msra.mxu0 0.0
    %855 = vmatprep.subr.mxu0 0.0
    %856 = vmatpush1.msra.mxu0 0.0
    %857 = vmatprep.subr.mxu0 0.0
    %858 = vmatpush1.msra.mxu0 0.0
    %859 = vmatprep.subr.mxu0 0.0
    %860 = vmatpush1.msra.mxu0 0.0
    %861 = vmatprep.subr.mxu0 0.0
    %862 = vmatpush1.msra.mxu0 0.0
    %863 = vmatprep.subr.mxu0 0.0
    %864 = vmatpush1.msra.mxu0 0.0
    %865 = vmatprep.subr.mxu0 0.0
    %866 = vmatpush1.msra.mxu0 0.0
    %867 = vmatprep.subr.mxu0 0.0
    %868 = vmatpush1.msra.mxu0 0.0
    %869 = vmatprep.subr.mxu0 0.0
    %870 = vmatpush1.msra.mxu0 %v841
    %871 = vmatprep.subr.mxu0 0.0
    %872 = vmatpush1.msra.mxu0 %v828
    %873 = vmatprep.subr.mxu0 0.0
    %874 = vmatpush1.msra.mxu0 %v827
    %875 = vmatprep.subr.mxu0 0.0
    %876 = vmatpush2.msra.mxu0 0.0
    %877 = vmatprep.subr.mxu0 0.0
    %878 = vmatpush2.msra.mxu0 0.0
    %879 = vmatprep.subr.mxu0 0.0
    %880 = vmatpush2.msra.mxu0 0.0
    %881 = vmatprep.subr.mxu0 0.0
    %882 = vmatpush2.msra.mxu0 0.0
    %883 = vmatprep.subr.mxu0 0.0
    %884 = vmatpush2.msra.mxu0 0.0
    %885 = vmatprep.subr.mxu0 0.0
    %886 = vmatpush2.msra.mxu0 0.0
    %887 = vmatprep.subr.mxu0 0.0
    %888 = vmatpush2.msra.mxu0 0.0
    %889 = vmatprep.subr.mxu0 0.0
    %890 = vmatpush2.msra.mxu0 0.0
    %891 = vmatprep.subr.mxu0 0.0
    %892 = vmatpush2.msra.mxu0 0.0
    %893 = vmatprep.subr.mxu0 0.0
    %894 = vmatpush2.msra.mxu0 0.0
    %895 = vmatprep.subr.mxu0 0.0
    %896 = vmatpush2.msra.mxu0 0.0
    %897 = vmatprep.subr.mxu0 0.0
    %898 = vmatpush2.msra.mxu0 0.0
    %899 = vmatprep.subr.mxu0 0.0
    %900 = vmatpush2.msra.mxu0 0.0
    %901 = vmatprep.subr.mxu0 0.0
    %902 = vmatpush2.msra.mxu0 0.0
    %903 = vmatprep.subr.mxu0 0.0
    %904 = vmatpush2.msra.mxu0 0.0
    %905 = vmatprep.subr.mxu0 0.0
    %906 = vmatpush2.msra.mxu0 0.0
    %907 = vmatprep.mubr.f32.mxu0 0.0
    %908 = vmatmul.mubr.f32.gmra.mxu0 %v837
    %v909 = vpop.f32.mrf.mxu0
    %v910 = vadd.f32 %v833, %v909
    %v911 = vpop.f32.mrf.mxu0
    %912 = vdwg.mxu0
    %v913 = vmax.f32 %v910, 0.0
    %914 = vset.pattern.permute.xlu0 2
    %915 = vperm.xlu0 %914, %v353
    %v916 = vpop.permute.xlu0 %915
    %v918 = vmul.f32 %v913, %v916
    %vm919 = vcmask 61440
    %v920 = vsel %vm919, %v918, 0.0
    %v921 = vrot.slane %v920, 4
    %v922 = vadd.f32 %v920, %v921
    %v923 = vrot.slane %v922, 2
    %v924 = vadd.f32 %v922, %v923
    %v925 = vrot.slane %v924, 1
    %v926 = vadd.f32 %v924, %v925
    %927 = vset.pattern.permute.xlu0 3
    %928 = vperm.xlu0 %927, %v353
    %v929 = vpop.permute.xlu0 %928
    %v931 = vadd.f32 %v926, %v929
    %vm932 = vcmask 57344
    %933 = vst.msk [vmem:[#allocation6] sm:$0x1] %vm932, %v931
    // Predicated region
    $region22: #{model_forward.1} parent=1 // pred_check
      _
    $region23: #{model_forward.1} parent=1 // pred_check_branch
      %935 = sbr.rel (0) target = $region25
    $region24: #{model_forward.1} parent=1 // pred_region
      %s937 = ssub.s32 16, 16
      %938 = vsyncadd [#allocation5], %s937
      %s940 = sshll.u32 [#allocation6], 4
      %s941 = int_to_ptr.vmem [resolvable:$true] %s940
      %943 = dma.vmem_to_hbm [thread:$0]  %s941, 16, %s4, [#allocation5]
    $region25: #{model_forward.1} parent=1 // pred_fallthru
      _
    // Predicated region
    $region26: #{model_forward.1} parent=1 // pred_check
      _
    $region27: #{model_forward.1} parent=1 // pred_check_branch
      %945 = sbr.rel (0) target = $region29
    $region28: #{model_forward.1} parent=1 // pred_region
      %946 = dma.done [#allocation5], 16
    $region29: #{model_forward.1} parent=1 // pred_fallthru
      _
    %947 = vsyncpa [#allocation4], 1
    %948 = vsyncpa [#allocation5], 1

</llo_original>
